<compile_context>
chip_gen: v5e
topology: v5e:2x2
jax: 0.10.0
libtpu: 0.0.40
codegen_flags: <defaults>
</compile_context>

<pallas_src>
import functools

import jax
import jax.numpy as jnp
from jax import lax
from jax.experimental import pallas as pl
from jax.experimental.pallas import tpu as pltpu


def _l2_normalize_kernel(x_ref, o_ref, *, eps):
    """Normalize one (1, C, T) tile over the C (sublane) axis.

    x_ref : (1, C, T)  input tile, T on the lane axis (multiple of 128)
    o_ref : (1, C, T)  output tile
    """
    x = x_ref[...].astype(jnp.float32)                      # (1, C, T)
    sq_sum = jnp.sum(x * x, axis=1, keepdims=True)          # (1, 1, T), XLU/VPU
    # x / max(||x||, eps)  ==  x * rsqrt(max(||x||^2, eps^2))   (sqrt monotone)
    inv_norm = lax.rsqrt(jnp.maximum(sq_sum, eps * eps))     # single EUP op
    o_ref[...] = (x * inv_norm).astype(o_ref.dtype)


def _pick_spatial_tile(m, c):
    """Largest 128-multiple tile of the flattened spatial axis that divides m
    and keeps the (in + out, double-buffered) VMEM footprint modest."""
    if m % 128 != 0:
        return m  # block must equal the full dim in this case
    budget_bytes = 8 * 1024 * 1024          # well under every chip's scoped VMEM
    per_lane_bytes = 4 * max(c, 1) * 4      # in+out, x2 double-buffer, f32 worst case
    max_t = max(128, (budget_bytes // per_lane_bytes) // 128 * 128)
    max_t = min(max_t, m)
    for cand in range(max_t, 0, -128):
        if m % cand == 0:
            return cand
    return m


@functools.partial(jax.jit, static_argnames=("eps",))
def l2_normalize(x, eps=1e-8):
    """F.normalize(x, p=2, dim=1, eps) for x of shape (N, C, *spatial)."""
    orig_shape = x.shape
    N, C = orig_shape[0], orig_shape[1]
    M = 1
    for d in orig_shape[2:]:
        M *= d

    # Contiguous-merge reshape: no transpose, no extra HBM pass.
    x3 = x.reshape(N, C, M)

    T = _pick_spatial_tile(M, C)
    grid = (N, M // T)

    kernel = functools.partial(_l2_normalize_kernel, eps=float(eps))

    itemsize = jnp.dtype(x.dtype).itemsize
    cost = pl.CostEstimate(
        flops=3 * N * C * M,            # square, sum, scale
        transcendentals=N * M,          # one rsqrt per spatial location
        bytes_accessed=2 * N * C * M * itemsize,
    )

    out3 = pl.pallas_call(
        kernel,
        out_shape=jax.ShapeDtypeStruct((N, C, M), x.dtype),
        grid_spec=pltpu.PrefetchScalarGridSpec(
            num_scalar_prefetch=0,
            grid=grid,
            in_specs=[pl.BlockSpec((1, C, T), lambda n, s: (n, 0, s))],
            out_specs=pl.BlockSpec((1, C, T), lambda n, s: (n, 0, s)),
        ),
        compiler_params=pltpu.CompilerParams(
            dimension_semantics=("parallel", "parallel")),
        cost_estimate=cost,
    )(x3)

    return out3.reshape(orig_shape)


if __name__ == "__main__":
    key = jax.random.PRNGKey(0)
    N, C, H, W = 2, 4, 16, 16
    x = jax.random.normal(key, (N, C, H, W), dtype=jnp.float32)

    out = l2_normalize(x)
    jax.block_until_ready(out)

    # Reference: F.normalize(x, p=2, dim=1, eps=1e-8)
    norm = jnp.sqrt(jnp.sum(x * x, axis=1, keepdims=True))
    ref = x / jnp.maximum(norm, 1e-8)

    assert out.shape == (N, C, H, W), out.shape
    assert float(jnp.max(jnp.abs(out - ref))) < 1e-5

    print("KERNEL_OK")
</pallas_src>

<mosaic_0001>
module attributes {stable_mosaic.version = 11 : i64} {
  func.func @_l2_normalize_kernel(%arg0: i32, %arg1: i32, %arg2: memref<1x4x256xf32, #tpu.memory_space<vmem>>, %arg3: memref<1x4x256xf32, #tpu.memory_space<vmem>>) attributes {dimension_semantics = [#tpu.dimension_semantics<parallel>, #tpu.dimension_semantics<parallel>], iteration_bounds = array<i64: 2, 1>, scalar_prefetch = 0 : i64, scratch_operands = 0 : i64, tpu.core_type = #tpu.core_type<tc>, window_params = [{transform_indices = @transform_0, window_bounds = array<i64: 1, 4, 256>}, {transform_indices = @transform_1, window_bounds = array<i64: 1, 4, 256>}]} {
    %c0 = arith.constant 0 : index
    %c0_0 = arith.constant 0 : index
    %c0_1 = arith.constant 0 : index
    %0 = vector.load %arg2[%c0, %c0_0, %c0_1] : memref<1x4x256xf32, #tpu.memory_space<vmem>>, vector<1x4x256xf32>
    %1 = arith.mulf %0, %0 : vector<1x4x256xf32>
    %cst = arith.constant dense<0.000000e+00> : vector<1x256xf32>
    %2 = vector.multi_reduction <add>, %1, %cst [1] : vector<1x4x256xf32> to vector<1x256xf32>
    %3 = vector.shape_cast %2 : vector<1x256xf32> to vector<1x1x256xf32>
    %cst_2 = arith.constant 1.000000e-16 : f32
    %4 = vector.broadcast %cst_2 : f32 to vector<1x1x256xf32>
    %5 = arith.maximumf %3, %4 : vector<1x1x256xf32>
    %6 = math.rsqrt %5 : vector<1x1x256xf32>
    %7 = vector.broadcast %6 : vector<1x1x256xf32> to vector<1x4x256xf32>
    %8 = arith.mulf %0, %7 : vector<1x4x256xf32>
    %c0_3 = arith.constant 0 : index
    %c0_4 = arith.constant 0 : index
    %c0_5 = arith.constant 0 : index
    %9 = vector.load %arg3[%c0_3, %c0_4, %c0_5] : memref<1x4x256xf32, #tpu.memory_space<vmem>>, vector<1x4x256xf32>
    tpu.vector_store %arg3[%c0_3, %c0_4, %c0_5], %8 {strides = array<i32>} : memref<1x4x256xf32, #tpu.memory_space<vmem>>, vector<1x4x256xf32>,
    return
  }
  func.func @transform_0(%arg0: i32, %arg1: i32) -> (i32, i32, i32) {
    %c0_i32 = arith.constant 0 : i32
    %c0_i32_0 = arith.constant 0 : i32
    return %arg0, %c0_i32, %arg1 : i32, i32, i32
  }
  func.func @transform_1(%arg0: i32, %arg1: i32) -> (i32, i32, i32) {
    %c0_i32 = arith.constant 0 : i32
    %c0_i32_0 = arith.constant 0 : i32
    return %arg0, %c0_i32, %arg1 : i32, i32, i32
  }
}

</mosaic_0001>

<llo_original>
// kernel: l2_normalize.1
$region0: #{l2_normalize.1}
  #allocation0 [shape = 'u32[]', space=smem, size = 0x4, offset = 0x4, fixed_abs, tag = 'smem constant byte address 0x4 - core index']
  #allocation1 [shape = 'u32[72,128]{1,0:T(1,128)}', space=vmem, size = 0x9000, scoped, tag = 'internal scratch']
  %s0 = inlined_call_operand.vmem [shape: f32[2,4,256], index: 0, kind: input, shape index: {}]
  %s1 = inlined_call_operand.vmem [shape: f32[2,4,256], index: 1, kind: output, shape index: {}]
  %s2 = sld [smem:[#allocation0]]
  $region37: #{l2_normalize.1} parent=0
    _
  %s4 = ssub.s32 1, %s2
  %s5 = scalar_select 0, %s4, %s2
  loop: start=0, step=1, limit=4
  $region2: #{l2_normalize.1} parent=0 // loop_pre_header
    _
  $region3: #{l2_normalize.1} parent=0 // loop_header
    %s7 = sphi 0, %s11
    %p8 = scmp.ge.s32.totalorder %s7, 4
    %s14 = sphi 0, %s26
    %s15 = sphi 0, %s22
    %s16 = sphi 0, %s14
    %s17 = sphi 0, %s15
    %s18 = sphi 0, %s16
    %s19 = sphi 0, %s17
    %s31 = sphi 0, %s33
    %s34 = sphi 0, %s31
    %s35 = sphi 0, %s34
    %s51 = sphi 0, %s35
    %s59 = sphi 0, %s61
    %s62 = sphi 0, %s59
    %s63 = sphi 0, %s62
    %s79 = sphi 0, %s63
  $region4: #{l2_normalize.1} parent=0 // loop_header_branch
    %10 = sbr.rel (%p8) target = $region8
  $region5: #{l2_normalize.1} parent=0 // loop_body
    %s12 = ssub.s32 %s7, 1
    %s13 = ssub.s32 %s7, 2
    %s20 = sadd.s32 1, %s15
    %p21 = scmp.ge.s32.totalorder %s20, 1
    %s22 = scalar_select %p21, 0, %s20
    %s23 = sadd.s32 1, %s14
    %s24 = scalar_select %p21, %s23, %s14
    %p25 = scmp.ge.s32.totalorder %s24, 2
    %s26 = scalar_select %p25, 0, %s24
    %s27 = ssub.s32 %s14, %s26
    %s28 = ssub.s32 %s15, %s22
    %s29 = sor.u32 %s27, %s28
    %p30 = scmp.eq.s32.totalorder %s29, 0
    %s32 = sadd.s32 %s31, 1
    %s33 = scalar_select %p30, %s31, %s32
    %p36 = pneg %p30
    %p37 = scmp.eq.s32.totalorder %s7, 1
    %p38 = por %p36, %p37
    %p39 = scmp.ne.s32.totalorder %s31, %s34
    %p40 = scmp.eq.s32.totalorder %s7, 0
    %p41 = por %p39, %p40
    %p42 = scmp.ne.s32.totalorder %s31, %s34
    %p43 = scmp.eq.s32.totalorder %s12, 1
    %p44 = por %p42, %p43
    %p45 = scmp.ne.s32.totalorder %s34, %s35
    %p46 = scmp.eq.s32.totalorder %s12, 0
    %p47 = por %p45, %p46
    %p48 = scmp.ne.s32.totalorder %s34, %s35
    %p49 = scmp.eq.s32.totalorder %s13, 1
    %p50 = por %p48, %p49
    %p52 = scmp.ne.s32.totalorder %s35, %s51
    %p53 = scmp.eq.s32.totalorder %s13, 0
    %p54 = por %p52, %p53
    %s55 = ssub.s32 %s14, %s26
    %s56 = ssub.s32 %s15, %s22
    %s57 = sor.u32 %s55, %s56
    %p58 = scmp.eq.s32.totalorder %s57, 0
    %s60 = sadd.s32 %s59, 1
    %s61 = scalar_select %p58, %s59, %s60
    %p64 = pneg %p58
    %p65 = scmp.eq.s32.totalorder %s7, 1
    %p66 = por %p64, %p65
    %p67 = scmp.ne.s32.totalorder %s59, %s62
    %p68 = scmp.eq.s32.totalorder %s7, 0
    %p69 = por %p67, %p68
    %p70 = scmp.ne.s32.totalorder %s59, %s62
    %p71 = scmp.eq.s32.totalorder %s12, 1
    %p72 = por %p70, %p71
    %p73 = scmp.ne.s32.totalorder %s62, %s63
    %p74 = scmp.eq.s32.totalorder %s12, 0
    %p75 = por %p73, %p74
    %p76 = scmp.ne.s32.totalorder %s62, %s63
    %p77 = scmp.eq.s32.totalorder %s13, 1
    %p78 = por %p76, %p77
    %p80 = scmp.ne.s32.totalorder %s63, %s79
    %p81 = scmp.eq.s32.totalorder %s13, 0
    %p82 = por %p80, %p81
    %p83 = scmp.le.s32.totalorder 1, %s7
    %p84 = scmp.lt.s32.totalorder %s7, 3
    %p85 = pnand %p83, %p84
    %p86 = pneg %p85
    // Predicated region
    $region9: #{l2_normalize.1} parent=5 // pred_check
      _
    $region10: #{l2_normalize.1} parent=5 // pred_check_branch
      %88 = sbr.rel (%p85) target = $region12
    $region11: #{l2_normalize.1} parent=5 // pred_region
      %s89 = ssub.s32 %s7, 1
    $region12: #{l2_normalize.1} parent=5 // pred_fallthru
      _
    %p90 = scmp.lt.s32.totalorder %s7, 2
    // Predicated region
    $region13: #{l2_normalize.1} parent=5 // pred_check
      %p91 = pneg %p90
    $region14: #{l2_normalize.1} parent=5 // pred_check_branch
      %93 = sbr.rel (%p91) target = $region16
    $region15: #{l2_normalize.1} parent=5 // pred_region
      // Predicated region
      $region17: #{l2_normalize.1} parent=15 // pred_check
        %p94 = pneg %p41
      $region18: #{l2_normalize.1} parent=15 // pred_check_branch
        %96 = sbr.rel (%p94) target = $region20
      $region19: #{l2_normalize.1} parent=15 // pred_region
        %s97 = smul.u32 2, %s15
        %p98 = scmp.lt.s32.totalorder %s14, 1
        %s99 = scalar_select %p98, %s14, 1
        %p100 = scmp.lt.s32.totalorder %s97, 1
        %s101 = scalar_select %p100, %s97, 1
        %s102 = smul.addr %s99, 2
        %s103 = sadd.s32 %s101, %s102
        %s104 = smul.addr %s103, 4
        %s105 = scalar_lea.vmem %s0, %s104
        %s106 = smul.u32 2, %s15
      $region20: #{l2_normalize.1} parent=15 // pred_fallthru
        _
    $region16: #{l2_normalize.1} parent=5 // pred_fallthru
      _
    %p107 = scmp.le.s32.totalorder 1, %s7
    %p108 = scmp.lt.s32.totalorder %s7, 3
    %p109 = pnand %p107, %p108
    %p110 = pneg %p109
    // Predicated region
    $region21: #{l2_normalize.1} parent=5 // pred_check
      _
    $region22: #{l2_normalize.1} parent=5 // pred_check_branch
      %112 = sbr.rel (%p109) target = $region24
    $region23: #{l2_normalize.1} parent=5 // pred_region
      %s113 = ssub.s32 %s7, 1
      %s114 = smul.u32 2, %s17
      %p115 = scmp.lt.s32.totalorder %s16, 1
      %s116 = scalar_select %p115, %s16, 1
      %p117 = scmp.lt.s32.totalorder %s114, 1
      %s118 = scalar_select %p117, %s114, 1
      %s119 = smul.addr %s116, 2
      %s120 = sadd.s32 %s118, %s119
      %s121 = smul.addr %s120, 4
      %s122 = scalar_lea.vmem %s0, %s121
      %p123 = pneg %p47
      %p124 = pneg %p44
      %p125 = pneg %p75
      %p126 = pneg %p72
      %s127 = smul.u32 2, %s17
      %p128 = scmp.lt.s32.totalorder %s16, 1
      %s129 = scalar_select %p128, %s16, 1
      %p130 = scmp.lt.s32.totalorder %s127, 1
      %s131 = scalar_select %p130, %s127, 1
      %s132 = smul.addr %s129, 2
      %s133 = sadd.s32 %s131, %s132
      %s134 = smul.addr %s133, 4
      %s135 = scalar_lea.vmem %s1, %s134
      %s136 = smul.u32 2, %s17
      %p137 = scmp.lt.s32.totalorder %s16, 1
      %s138 = scalar_select %p137, %s16, 1
      %p139 = scmp.lt.s32.totalorder %s136, 1
      %s140 = scalar_select %p139, %s136, 1
      %s141 = smul.addr %s138, 2
      %s142 = sadd.s32 %s140, %s141
      %s143 = smul.addr %s142, 4
      %s144 = scalar_lea.vmem %s0, %s143
      %s145 = smul.u32 2, %s17
      %s146 = smul.u32 2, %s17
      %p147 = scmp.lt.s32.totalorder %s16, 1
      %s148 = scalar_select %p147, %s16, 1
      %p149 = scmp.lt.s32.totalorder %s146, 1
      %s150 = scalar_select %p149, %s146, 1
      %s151 = smul.addr %s148, 2
      %s152 = sadd.s32 %s150, %s151
      %s153 = smul.addr %s152, 4
      %s154 = scalar_lea.vmem %s1, %s153
      %s155 = smul.u32 2, %s17
      %v156 = vld [vmem:[%s144] sm:$0xff]
      %v157 = vmul.f32 %v156, %v156
      %159 = vst [vmem:[#allocation1] ss:$2 sm:$0xff] %v157
      %v160 = vld.sshfl [vmem:[#allocation1] sm:$0xff pattern:$0x75316420]
      %v161 = vld.sshfl [vmem:[#allocation1 + $0x8] sm:$0xff pattern:$0x75316420]
      %vm164 = vcmask 1043456
      %v165 = vsel %vm164, %v160, 0.0
      %v166 = vrot.slane %v165, 4
      %v167 = vadd.f32 %v165, %v166
      %v168 = vrot.slane %v167, 2
      %v169 = vadd.f32 %v167, %v168
      %v170 = vrot.slane %v169, 1
      %v171 = vadd.f32 %v169, %v170
      %v172 = vsel %vm164, %v161, 0.0
      %v173 = vrot.slane %v172, 4
      %v174 = vadd.f32 %v172, %v173
      %v175 = vrot.slane %v174, 2
      %v176 = vadd.f32 %v174, %v175
      %v177 = vrot.slane %v176, 1
      %v178 = vadd.f32 %v176, %v177
      %v179 = vmax.f32 %v171, 1e-16
      %v180 = vmax.f32 %v178, 1e-16
      %v181 = vrsqrt.pop %v179
      %v182 = vmul.f32 %v181, %v179
      %v183 = vmul.f32 %v182, %v181
      %v184 = vmul.f32 0.5, %v183
      %v185 = vsub.f32 1.5, %v184
      %v186 = vmul.f32 %v181, %v185
      %vm187 = vweird.f32 %v179
      %vm188 = vweird.f32 %v181
      %vm189 = vmor %vm187, %vm188
      %v190 = vsel %vm189, %v181, %v186
      %v191 = vrsqrt.pop %v180
      %v192 = vmul.f32 %v191, %v180
      %v193 = vmul.f32 %v192, %v191
      %v194 = vmul.f32 0.5, %v193
      %v195 = vsub.f32 1.5, %v194
      %v196 = vmul.f32 %v191, %v195
      %vm197 = vweird.f32 %v180
      %vm198 = vweird.f32 %v191
      %vm199 = vmor %vm197, %vm198
      %v200 = vsel %vm199, %v191, %v196
      %v203 = vrot.slane %v200, 4
      %v204 = vsel %vm164, %v190, %v203
      %v206 = vmul.f32 %v156, %v204
      %207 = vst [vmem:[%s154] sm:$0xff] %v206
      %s208 = smul.u32 2, %s17
      %p209 = scmp.lt.s32.totalorder %s16, 1
      %s210 = scalar_select %p209, %s16, 1
      %p211 = scmp.lt.s32.totalorder %s208, 1
      %s212 = scalar_select %p211, %s208, 1
      %s213 = smul.addr %s210, 2
      %s214 = sadd.s32 %s212, %s213
      %s215 = smul.addr %s214, 4
      %s216 = scalar_lea.vmem %s1, %s215
      // Predicated region
      $region25: #{l2_normalize.1} parent=23 // pred_check
        %p217 = pneg %p72
      $region26: #{l2_normalize.1} parent=23 // pred_check_branch
        %219 = sbr.rel (%p217) target = $region28
      $region27: #{l2_normalize.1} parent=23 // pred_region
        %s220 = smul.u32 2, %s17
      $region28: #{l2_normalize.1} parent=23 // pred_fallthru
        _
    $region24: #{l2_normalize.1} parent=5 // pred_fallthru
      _
    %p221 = scmp.le.s32.totalorder 2, %s7
    // Predicated region
    $region29: #{l2_normalize.1} parent=5 // pred_check
      %p222 = pneg %p221
    $region30: #{l2_normalize.1} parent=5 // pred_check_branch
      %224 = sbr.rel (%p222) target = $region32
    $region31: #{l2_normalize.1} parent=5 // pred_region
      %s225 = ssub.s32 %s7, 2
      // Predicated region
      $region33: #{l2_normalize.1} parent=31 // pred_check
        %p226 = pneg %p78
      $region34: #{l2_normalize.1} parent=31 // pred_check_branch
        %228 = sbr.rel (%p226) target = $region36
      $region35: #{l2_normalize.1} parent=31 // pred_region
        %s229 = smul.u32 2, %s19
        %p230 = scmp.lt.s32.totalorder %s18, 1
        %s231 = scalar_select %p230, %s18, 1
        %p232 = scmp.lt.s32.totalorder %s229, 1
        %s233 = scalar_select %p232, %s229, 1
        %s234 = smul.addr %s231, 2
        %s235 = sadd.s32 %s233, %s234
        %s236 = smul.addr %s235, 4
        %s237 = scalar_lea.vmem %s1, %s236
      $region36: #{l2_normalize.1} parent=31 // pred_fallthru
        _
    $region32: #{l2_normalize.1} parent=5 // pred_fallthru
      _
  $region6: #{l2_normalize.1} parent=0 // loop_footer
    %s11 = sadd.s32 1, %s7
  $region7: #{l2_normalize.1} parent=0 // loop_footer_branch
    %6 = sbr.rel target = $region3
  $region8: #{l2_normalize.1} parent=0 // loop_exit
    _

</llo_original>
